<compile_context>
chip_gen: v7x
topology: tpu7x:2x2x1
jax: 0.10.0
libtpu: 0.0.40
codegen_flags: <defaults>
</compile_context>

<pallas_src>
import jax
import jax.numpy as jnp
from jax.experimental import pallas as pl
from jax.experimental.pallas import tpu as pltpu


def _round_up(x, m):
    return ((x + m - 1) // m) * m


def _cdiv(a, b):
    return (a + b - 1) // b


def _vmem_capacity_bytes(default=64 * 1024 * 1024):
    """Physical per-core VMEM bytes; falls back to a v7x-safe 64 MiB."""
    try:
        cap = getattr(pltpu.get_tpu_info(), "vmem_capacity_bytes", None)
        if cap:
            return int(cap)
    except Exception:
        pass
    return default


def _pick_row_tile(batch, tm_cap):
    """Row tile that minimizes batch padding; prefers >=2 row blocks (v7x)."""
    tm_cap = max(8, (tm_cap // 8) * 8)
    nb = _cdiv(batch, tm_cap)
    tm = _round_up(_cdiv(batch, nb), 8)
    if nb == 1 and tm >= 16:          # give the second v7x TensorCore work
        nb = 2
        tm = _round_up(_cdiv(batch, 2), 8)
    return tm, nb * tm


def _linear_kernel(x_ref, w_ref, b_ref, o_ref):
    # x_ref: (TM, K)   w_ref: (K, N_pad)   b_ref: (1, N_pad)   o_ref: (TM, N_pad)
    acc = jnp.dot(x_ref[...], w_ref[...], preferred_element_type=jnp.float32)
    o_ref[...] = (acc + b_ref[...].astype(jnp.float32)).astype(o_ref.dtype)


def _linear_kernel_ktiled(x_ref, w_ref, b_ref, o_ref, acc_ref):
    # grid = (row_blocks, k_blocks); K is the "arbitrary" reduction axis.
    k = pl.program_id(1)

    @pl.when(k == 0)
    def _():
        acc_ref[...] = jnp.zeros_like(acc_ref)

    acc_ref[...] += jnp.dot(x_ref[...], w_ref[...],
                            preferred_element_type=jnp.float32)

    @pl.when(k == pl.num_programs(1) - 1)
    def _():
        o_ref[...] = (acc_ref[...] + b_ref[...].astype(jnp.float32)
                      ).astype(o_ref.dtype)


def linear_svm_forward(x, weight, bias, *, max_block_rows=4096,
                       compute_dtype=None):
    """Forward of LinearSVM:  y = x.view(B, -1) @ W^T + b.

    x:      (B, ...) any trailing shape, flattened to (B, input_size)
    weight: (num_classes, input_size)   -- PyTorch nn.Linear convention
    bias:   (num_classes,)
    compute_dtype: optional narrower matmul dtype (e.g. jnp.bfloat16); the
        accumulation stays f32 and the output keeps x's dtype.
    returns (B, num_classes)
    """
    B = x.shape[0]
    out_dtype = x.dtype
    x2d = x.reshape(B, -1)                       # same as torch .view(B, -1)
    num_classes, input_size = weight.shape
    assert x2d.shape[1] == input_size
    K = input_size

    # One-time HBM transpose: MXU-native (M,K)x(K,N), class dim lane-dense.
    w_t = weight.T                               # (K, num_classes)
    if compute_dtype is not None:
        x2d = x2d.astype(compute_dtype)
        w_t = w_t.astype(compute_dtype)
    dtype = x2d.dtype
    itemsize = jnp.dtype(dtype).itemsize

    n_pad = _round_up(num_classes, 128)          # lane-dense output columns

    # Per-generation VMEM budget (v5e/v6e: 128 MiB, v7x: 64 MiB per core).
    vmem_cap = _vmem_capacity_bytes()
    vmem_limit = int(vmem_cap * 0.85)
    tile_budget = int(vmem_cap * 0.60)

    bias_bytes = 2 * n_pad * max(itemsize, 4)
    weight_bytes = K * n_pad * itemsize          # one resident copy
    use_k_tiling = weight_bytes > tile_budget // 2

    if not use_k_tiling:
        # ---- Path A: full-K blocks, weight & bias resident in VMEM ----------
        per_row = (2 * K + 2 * n_pad) * itemsize        # double-buffered x / out
        avail = max(0, tile_budget - weight_bytes - bias_bytes)
        tm_cap = min(max(8, avail // per_row), max_block_rows)
        tm, b_pad = _pick_row_tile(B, tm_cap)

        x_p = jnp.pad(x2d, ((0, b_pad - B), (0, 0)))
        w_p = jnp.pad(w_t, ((0, 0), (0, n_pad - num_classes)))
        b_p = jnp.pad(bias, ((0, n_pad - num_classes),)).reshape(1, n_pad)

        def _call(single_buffer_constants):
            const = (dict(pipeline_mode=pl.Buffered(1))
                     if single_buffer_constants else {})
            return pl.pallas_call(
                _linear_kernel,
                out_shape=jax.ShapeDtypeStruct((b_pad, n_pad), out_dtype),
                grid_spec=pltpu.PrefetchScalarGridSpec(
                    num_scalar_prefetch=0,
                    grid=(b_pad // tm,),
                    in_specs=[
                        pl.BlockSpec((tm, K), lambda i: (i, 0)),
                        pl.BlockSpec((K, n_pad), lambda i: (0, 0), **const),
                        pl.BlockSpec((1, n_pad), lambda i: (0, 0), **const),
                    ],
                    out_specs=pl.BlockSpec((tm, n_pad), lambda i: (i, 0)),
                ),
                compiler_params=pltpu.CompilerParams(
                    dimension_semantics=("parallel",),
                    vmem_limit_bytes=vmem_limit),
                cost_estimate=pl.CostEstimate(
                    flops=2 * b_pad * K * n_pad,
                    transcendentals=0,
                    bytes_accessed=(b_pad * K + K * n_pad + n_pad
                                    + b_pad * n_pad) * itemsize),
            )(x_p, w_p, b_p)
    else:
        # ---- Path B: K-tiled reduction with an f32 VMEM accumulator ---------
        tk_cap = max(128,
                     ((tile_budget // 2) // (2 * n_pad * itemsize)) // 128 * 128)
        tk = min(tk_cap, _round_up(K, 128))
        k_pad = _round_up(K, tk)

        per_row = (2 * tk + 2 * n_pad) * itemsize + n_pad * 4   # + f32 acc
        avail = max(0, tile_budget - 2 * tk * n_pad * itemsize - bias_bytes)
        tm_cap = min(max(8, avail // per_row), max_block_rows)
        tm, b_pad = _pick_row_tile(B, tm_cap)

        x_p = jnp.pad(x2d, ((0, b_pad - B), (0, k_pad - K)))
        w_p = jnp.pad(w_t, ((0, k_pad - K), (0, n_pad - num_classes)))
        b_p = jnp.pad(bias, ((0, n_pad - num_classes),)).reshape(1, n_pad)

        def _call(single_buffer_constants):
            const = (dict(pipeline_mode=pl.Buffered(1))
                     if single_buffer_constants else {})
            return pl.pallas_call(
                _linear_kernel_ktiled,
                out_shape=jax.ShapeDtypeStruct((b_pad, n_pad), out_dtype),
                grid_spec=pltpu.PrefetchScalarGridSpec(
                    num_scalar_prefetch=0,
                    grid=(b_pad // tm, k_pad // tk),
                    in_specs=[
                        pl.BlockSpec((tm, tk), lambda i, k: (i, k)),
                        pl.BlockSpec((tk, n_pad), lambda i, k: (k, 0)),
                        pl.BlockSpec((1, n_pad), lambda i, k: (0, 0), **const),
                    ],
                    out_specs=pl.BlockSpec((tm, n_pad), lambda i, k: (i, 0)),
                    scratch_shapes=[pltpu.VMEM((tm, n_pad), jnp.float32)],
                ),
                compiler_params=pltpu.CompilerParams(
                    dimension_semantics=("parallel", "arbitrary"),
                    vmem_limit_bytes=vmem_limit),
                cost_estimate=pl.CostEstimate(
                    flops=2 * b_pad * k_pad * n_pad,
                    transcendentals=0,
                    bytes_accessed=(b_pad * k_pad + k_pad * n_pad + n_pad
                                    + b_pad * n_pad) * itemsize),
            )(x_p, w_p, b_p)

    try:
        out = _call(True)       # single-buffer the constant weight/bias blocks
    except Exception:           # pipeline_mode/Buffered(1) unsupported: retry
        out = _call(False)

    # Strip batch / class padding.
    return out[:B, :num_classes]


if __name__ == "__main__":
    # Small deterministic setup consistent with the module:
    # x of shape (2, 4, 8) flattens to (2, 32); input_size=32, num_classes=1.
    key = jax.random.PRNGKey(0)
    k_x, k_w, k_b = jax.random.split(key, 3)

    B, input_size, num_classes = 2, 32, 1
    x = jax.random.normal(k_x, (B, 4, 8), dtype=jnp.float32)

    # Deterministic params mimicking nn.Linear's uniform(-1/sqrt(in), 1/sqrt(in)).
    bound = 1.0 / jnp.sqrt(jnp.float32(input_size))
    weight = jax.random.uniform(k_w, (num_classes, input_size),
                                minval=-bound, maxval=bound, dtype=jnp.float32)
    bias = jax.random.uniform(k_b, (num_classes,),
                              minval=-bound, maxval=bound, dtype=jnp.float32)

    out = linear_svm_forward(x, weight, bias)
    out = jax.block_until_ready(out)

    # Reference check in plain JAX (same semantics as torch nn.Linear).
    ref = x.reshape(B, -1) @ weight.T + bias
    assert out.shape == (B, num_classes)
    assert jnp.allclose(out, ref, atol=1e-5, rtol=1e-5)

    print("KERNEL_OK")
</pallas_src>

<mosaic_0001>
module attributes {stable_mosaic.version = 11 : i64} {
  func.func @_linear_kernel(%arg0: i32, %arg1: memref<8x32xf32, #tpu.memory_space<vmem>>, %arg2: memref<32x128xf32, #tpu.memory_space<vmem>>, %arg3: memref<1x128xf32, #tpu.memory_space<vmem>>, %arg4: memref<8x128xf32, #tpu.memory_space<vmem>>) attributes {dimension_semantics = [#tpu.dimension_semantics<parallel>], iteration_bounds = array<i64: 1>, scalar_prefetch = 0 : i64, scratch_operands = 0 : i64, tpu.core_type = #tpu.core_type<tc>, window_params = [{transform_indices = @transform_0, window_bounds = array<i64: 8, 32>}, {pipeline_mode = #tpu.pipeline_mode<synchronous>, transform_indices = @transform_1, window_bounds = array<i64: 32, 128>}, {pipeline_mode = #tpu.pipeline_mode<synchronous>, transform_indices = @transform_2, window_bounds = array<i64: 1, 128>}, {transform_indices = @transform_3, window_bounds = array<i64: 8, 128>}]} {
    %c0 = arith.constant 0 : index
    %c0_0 = arith.constant 0 : index
    %0 = vector.load %arg1[%c0, %c0_0] : memref<8x32xf32, #tpu.memory_space<vmem>>, vector<8x32xf32>
    %c0_1 = arith.constant 0 : index
    %c0_2 = arith.constant 0 : index
    %1 = vector.load %arg2[%c0_1, %c0_2] : memref<32x128xf32, #tpu.memory_space<vmem>>, vector<32x128xf32>
    %cst = arith.constant dense<0.000000e+00> : vector<8x128xf32>
    %2 = tpu.matmul %0, %1, %cst {dimension_numbers = #tpu.dot_dimension_numbers<[1], [0], [0], [1], [0, 0, 1, 1], [], []>} : vector<8x32xf32>, vector<32x128xf32>, vector<8x128xf32> -> vector<8x128xf32>
    %c0_3 = arith.constant 0 : index
    %c0_4 = arith.constant 0 : index
    %3 = vector.load %arg3[%c0_3, %c0_4] : memref<1x128xf32, #tpu.memory_space<vmem>>, vector<1x128xf32>
    %4 = vector.broadcast %3 : vector<1x128xf32> to vector<8x128xf32>
    %5 = arith.addf %2, %4 : vector<8x128xf32>
    %c0_5 = arith.constant 0 : index
    %c0_6 = arith.constant 0 : index
    %6 = vector.load %arg4[%c0_5, %c0_6] : memref<8x128xf32, #tpu.memory_space<vmem>>, vector<8x128xf32>
    tpu.vector_store %arg4[%c0_5, %c0_6], %5 {strides = array<i32>} : memref<8x128xf32, #tpu.memory_space<vmem>>, vector<8x128xf32>,
    return
  }
  func.func @transform_0(%arg0: i32) -> (i32, i32) {
    %c0_i32 = arith.constant 0 : i32
    %c0_i32_0 = arith.constant 0 : i32
    return %arg0, %c0_i32 : i32, i32
  }
  func.func @transform_1(%arg0: i32) -> (i32, i32) {
    %c0_i32 = arith.constant 0 : i32
    %c0_i32_0 = arith.constant 0 : i32
    %c0_i32_1 = arith.constant 0 : i32
    return %c0_i32, %c0_i32_0 : i32, i32
  }
  func.func @transform_2(%arg0: i32) -> (i32, i32) {
    %c0_i32 = arith.constant 0 : i32
    %c0_i32_0 = arith.constant 0 : i32
    %c0_i32_1 = arith.constant 0 : i32
    return %c0_i32, %c0_i32_0 : i32, i32
  }
  func.func @transform_3(%arg0: i32) -> (i32, i32) {
    %c0_i32 = arith.constant 0 : i32
    %c0_i32_0 = arith.constant 0 : i32
    return %arg0, %c0_i32 : i32, i32
  }
}

module attributes {stable_mosaic.version = 11 : i64} {
  func.func @_linear_kernel(%arg0: i32, %arg1: memref<8x32xf32, #tpu.memory_space<vmem>>, %arg2: memref<32x128xf32, #tpu.memory_space<vmem>>, %arg3: memref<1x128xf32, #tpu.memory_space<vmem>>, %arg4: memref<8x128xf32, #tpu.memory_space<vmem>>) attributes {dimension_semantics = [#tpu.dimension_semantics<parallel>], iteration_bounds = array<i64: 1>, scalar_prefetch = 0 : i64, scratch_operands = 0 : i64, tpu.core_type = #tpu.core_type<tc>, window_params = [{transform_indices = @transform_0, window_bounds = array<i64: 8, 32>}, {pipeline_mode = #tpu.pipeline_mode<synchronous>, transform_indices = @transform_1, window_bounds = array<i64: 32, 128>}, {pipeline_mode = #tpu.pipeline_mode<synchronous>, transform_indices = @transform_2, window_bounds = array<i64: 1, 128>}, {transform_indices = @transform_3, window_bounds = array<i64: 8, 128>}]} {
    %c0 = arith.constant 0 : index
    %c0_0 = arith.constant 0 : index
    %0 = vector.load %arg1[%c0, %c0_0] : memref<8x32xf32, #tpu.memory_space<vmem>>, vector<8x32xf32>
    %c0_1 = arith.constant 0 : index
    %c0_2 = arith.constant 0 : index
    %1 = vector.load %arg2[%c0_1, %c0_2] : memref<32x128xf32, #tpu.memory_space<vmem>>, vector<32x128xf32>
    %cst = arith.constant dense<0.000000e+00> : vector<8x128xf32>
    %2 = tpu.matmul %0, %1, %cst {dimension_numbers = #tpu.dot_dimension_numbers<[1], [0], [0], [1], [0, 0, 1, 1], [], []>} : vector<8x32xf32>, vector<32x128xf32>, vector<8x128xf32> -> vector<8x128xf32>
    %c0_3 = arith.constant 0 : index
    %c0_4 = arith.constant 0 : index
    %3 = vector.load %arg3[%c0_3, %c0_4] : memref<1x128xf32, #tpu.memory_space<vmem>>, vector<1x128xf32>
    %4 = vector.broadcast %3 : vector<1x128xf32> to vector<8x128xf32>
    %5 = arith.addf %2, %4 : vector<8x128xf32>
    %c0_5 = arith.constant 0 : index
    %c0_6 = arith.constant 0 : index
    %6 = vector.load %arg4[%c0_5, %c0_6] : memref<8x128xf32, #tpu.memory_space<vmem>>, vector<8x128xf32>
    tpu.vector_store %arg4[%c0_5, %c0_6], %5 {strides = array<i32>} : memref<8x128xf32, #tpu.memory_space<vmem>>, vector<8x128xf32>,
    return
  }
  func.func @transform_0(%arg0: i32) -> (i32, i32) {
    %c0_i32 = arith.constant 0 : i32
    %c0_i32_0 = arith.constant 0 : i32
    return %arg0, %c0_i32 : i32, i32
  }
  func.func @transform_1(%arg0: i32) -> (i32, i32) {
    %c0_i32 = arith.constant 0 : i32
    %c0_i32_0 = arith.constant 0 : i32
    %c0_i32_1 = arith.constant 0 : i32
    return %c0_i32, %c0_i32_0 : i32, i32
  }
  func.func @transform_2(%arg0: i32) -> (i32, i32) {
    %c0_i32 = arith.constant 0 : i32
    %c0_i32_0 = arith.constant 0 : i32
    %c0_i32_1 = arith.constant 0 : i32
    return %c0_i32, %c0_i32_0 : i32, i32
  }
  func.func @transform_3(%arg0: i32) -> (i32, i32) {
    %c0_i32 = arith.constant 0 : i32
    %c0_i32_0 = arith.constant 0 : i32
    return %arg0, %c0_i32 : i32, i32
  }
}

</mosaic_0001>

<llo_original>
// kernel: tpu_custom_call.1
$region0: #{tpu_custom_call.1}
  #allocation0 [shape = 'u32[]', space=smem, size = 0x4, offset = 0x4, fixed_abs, tag = 'smem constant byte address 0x4 - core index']
  #allocation1 [shape = 'u32[144,128]{1,0:T(1,128)}', space=vmem, size = 0x12000, scoped, tag = 'internal scratch']
  %s0 = inlined_call_operand.hbm [shape: f32[8,32], index: 0, kind: input, shape index: {}]
  %s1 = inlined_call_operand.hbm [shape: f32[32,128], index: 1, kind: input, shape index: {}]
  %s2 = inlined_call_operand.vmem [shape: f32[1,128], index: 2, kind: input, shape index: {}]
  %s3 = inlined_call_operand.hbm [shape: f32[8,128], index: 3, kind: output, shape index: {}]
  %s4 = sld [smem:[#allocation0]]
  $region30: #{tpu_custom_call.1} parent=0
    _
  %s6 = ssub.s32 1, %s4
  %s7 = scalar_select 0, %s6, %s4
  $region1: #{tpu_custom_call.1} parent=0
    #allocation2 [shape = 'u8[4096]{0}', space=vmem, size = 0x1000, scoped, tag = 'input window, operand 0, single buffered']
    #allocation3 [shape = 's32[1]{0}', space=sflag, size = 0x4, scoped, tag = 'scoped memory for tpu_custom_call.1']
    #allocation4 [shape = 's32[1]{0}', space=sflag, size = 0x4, scoped, tag = 'scoped memory for tpu_custom_call.1']
    #allocation5 [shape = 'u8[16384]{0}', space=vmem, size = 0x4000, scoped, tag = 'input window, operand 1, single buffered']
    #allocation6 [shape = 's32[1]{0}', space=sflag, size = 0x4, scoped, tag = 'scoped memory for tpu_custom_call.1']
    #allocation7 [shape = 'u8[4096]{0}', space=vmem, size = 0x1000, scoped, tag = 'output window, operand 0, single buffered']
    %8 = vsyncpa [#allocation3], 0
    %9 = vsyncpa [#allocation6], 0
    %10 = vsyncpa [#allocation4], 0
    // Predicated region
    $region2: #{tpu_custom_call.1} parent=1 // pred_check
      _
    $region3: #{tpu_custom_call.1} parent=1 // pred_check_branch
      %12 = sbr.rel (0) target = $region5
    $region4: #{tpu_custom_call.1} parent=1 // pred_region
      %s14 = ssub.s32 128, 128
      %15 = vsyncadd [#allocation3], %s14
      %s17 = sshll.u32 [#allocation2], 4
      %s18 = int_to_ptr.vmem [resolvable:$true] %s17
      %20 = dma.hbm_to_vmem [thread:$0]  %s0, 128, %s18, [#allocation3]
    $region5: #{tpu_custom_call.1} parent=1 // pred_fallthru
      _
    // Predicated region
    $region6: #{tpu_custom_call.1} parent=1 // pred_check
      _
    $region7: #{tpu_custom_call.1} parent=1 // pred_check_branch
      %22 = sbr.rel (0) target = $region9
    $region8: #{tpu_custom_call.1} parent=1 // pred_region
      %s24 = ssub.s32 512, 512
      %25 = vsyncadd [#allocation6], %s24
      %s26 = sshll.u32 [#allocation5], 4
      %s27 = int_to_ptr.vmem [resolvable:$true] %s26
      %32 = dma.hbm_to_vmem [thread:$0]  %s1, 512, %s27, [#allocation6], 128, 128, 8
    $region9: #{tpu_custom_call.1} parent=1 // pred_fallthru
      _
    // Predicated region
    $region10: #{tpu_custom_call.1} parent=1 // pred_check
      _
    $region11: #{tpu_custom_call.1} parent=1 // pred_check_branch
      %34 = sbr.rel (0) target = $region13
    $region12: #{tpu_custom_call.1} parent=1 // pred_region
      _
    $region13: #{tpu_custom_call.1} parent=1 // pred_fallthru
      _
    // Predicated region
    $region14: #{tpu_custom_call.1} parent=1 // pred_check
      _
    $region15: #{tpu_custom_call.1} parent=1 // pred_check_branch
      %36 = sbr.rel (0) target = $region17
    $region16: #{tpu_custom_call.1} parent=1 // pred_region
      %37 = dma.done [#allocation3], 128
    $region17: #{tpu_custom_call.1} parent=1 // pred_fallthru
      _
    // Predicated region
    $region18: #{tpu_custom_call.1} parent=1 // pred_check
      _
    $region19: #{tpu_custom_call.1} parent=1 // pred_check_branch
      %39 = sbr.rel (0) target = $region21
    $region20: #{tpu_custom_call.1} parent=1 // pred_region
      %40 = dma.done [#allocation6], 512
    $region21: #{tpu_custom_call.1} parent=1 // pred_fallthru
      _
    %v41 = vld [vmem:[#allocation2] sm:$0xff]
    %v42 = vld [vmem:[#allocation5] sm:$0xff]
    %v43 = vld [vmem:[#allocation5 + $0x8] sm:$0xff]
    %v44 = vld [vmem:[#allocation5 + $0x10] sm:$0xff]
    %v45 = vld [vmem:[#allocation5 + $0x18] sm:$0xff]
    %v46 = vld [vmem:[%s2] sm:$0x1]
    %v48 = vlaneseq
    %v49 = vshrl.u32 %v48, 7
    %v50 = vsub.s32 0, %v49
    %v51 = vrot.slane %v46, %v50
    %vm53 = vcmask 261120
    %v55 = vsel %vm53, %v41, 0
    %57 = vmatprep.subr.mxu0 0.0
    %58 = vmatpush1.msra.mxu0 %v42
    %59 = vmatprep.subr.mxu0 0.0
    %60 = vmatpush1.msra.mxu0 %v43
    %61 = vmatprep.subr.mxu0 0.0
    %62 = vmatpush1.msra.mxu0 %v44
    %63 = vmatprep.subr.mxu0 0.0
    %64 = vmatpush1.msra.mxu0 %v45
    %65 = vmatprep.subr.mxu0 0.0
    %66 = vmatpush1.msra.mxu0 0.0
    %67 = vmatprep.subr.mxu0 0.0
    %68 = vmatpush1.msra.mxu0 0.0
    %69 = vmatprep.subr.mxu0 0.0
    %70 = vmatpush1.msra.mxu0 0.0
    %71 = vmatprep.subr.mxu0 0.0
    %72 = vmatpush1.msra.mxu0 0.0
    %73 = vmatprep.subr.mxu0 0.0
    %74 = vmatpush1.msra.mxu0 0.0
    %75 = vmatprep.subr.mxu0 0.0
    %76 = vmatpush1.msra.mxu0 0.0
    %77 = vmatprep.subr.mxu0 0.0
    %78 = vmatpush1.msra.mxu0 0.0
    %79 = vmatprep.subr.mxu0 0.0
    %80 = vmatpush1.msra.mxu0 0.0
    %81 = vmatprep.subr.mxu0 0.0
    %82 = vmatpush1.msra.mxu0 0.0
    %83 = vmatprep.subr.mxu0 0.0
    %84 = vmatpush1.msra.mxu0 0.0
    %85 = vmatprep.subr.mxu0 0.0
    %86 = vmatpush1.msra.mxu0 0.0
    %87 = vmatprep.subr.mxu0 0.0
    %88 = vmatpush1.msra.mxu0 0.0
    %89 = vmatprep.subr.mxu0 0.0
    %90 = vmatpush1.msra.mxu0 0.0
    %91 = vmatprep.subr.mxu0 0.0
    %92 = vmatpush1.msra.mxu0 0.0
    %93 = vmatprep.subr.mxu0 0.0
    %94 = vmatpush1.msra.mxu0 0.0
    %95 = vmatprep.subr.mxu0 0.0
    %96 = vmatpush1.msra.mxu0 0.0
    %97 = vmatprep.subr.mxu0 0.0
    %98 = vmatpush1.msra.mxu0 0.0
    %99 = vmatprep.subr.mxu0 0.0
    %100 = vmatpush1.msra.mxu0 0.0
    %101 = vmatprep.subr.mxu0 0.0
    %102 = vmatpush1.msra.mxu0 0.0
    %103 = vmatprep.subr.mxu0 0.0
    %104 = vmatpush1.msra.mxu0 0.0
    %105 = vmatprep.subr.mxu0 0.0
    %106 = vmatpush1.msra.mxu0 0.0
    %107 = vmatprep.subr.mxu0 0.0
    %108 = vmatpush1.msra.mxu0 0.0
    %109 = vmatprep.subr.mxu0 0.0
    %110 = vmatpush1.msra.mxu0 0.0
    %111 = vmatprep.subr.mxu0 0.0
    %112 = vmatpush1.msra.mxu0 0.0
    %113 = vmatprep.subr.mxu0 0.0
    %114 = vmatpush1.msra.mxu0 0.0
    %115 = vmatprep.subr.mxu0 0.0
    %116 = vmatpush1.msra.mxu0 0.0
    %117 = vmatprep.subr.mxu0 0.0
    %118 = vmatpush1.msra.mxu0 0.0
    %119 = vmatprep.subr.mxu0 0.0
    %120 = vmatpush1.msra.mxu0 0.0
    %121 = vmatprep.mubr.f32.mxu0 0.0
    %122 = vmatmul.mubr.f32.gmra.mrb[0].mxu0 %v55
    %v123 = vpop.f32.mrb[0].mxu0
    %v124 = vadd.f32 %v51, %v123
    %v125 = vpop.f32.mrb[0].mxu0
    %126 = vdwg.mxu0
    %127 = vst [vmem:[#allocation7] sm:$0xff] %v124
    // Predicated region
    $region22: #{tpu_custom_call.1} parent=1 // pred_check
      _
    $region23: #{tpu_custom_call.1} parent=1 // pred_check_branch
      %129 = sbr.rel (0) target = $region25
    $region24: #{tpu_custom_call.1} parent=1 // pred_region
      %s131 = ssub.s32 128, 128
      %132 = vsyncadd [#allocation4], %s131
      %s134 = sshll.u32 [#allocation7], 4
      %s135 = int_to_ptr.vmem [resolvable:$true] %s134
      %137 = dma.vmem_to_hbm [thread:$0]  %s135, 128, %s3, [#allocation4]
    $region25: #{tpu_custom_call.1} parent=1 // pred_fallthru
      _
    // Predicated region
    $region26: #{tpu_custom_call.1} parent=1 // pred_check
      _
    $region27: #{tpu_custom_call.1} parent=1 // pred_check_branch
      %139 = sbr.rel (0) target = $region29
    $region28: #{tpu_custom_call.1} parent=1 // pred_region
      %140 = dma.done [#allocation4], 128
    $region29: #{tpu_custom_call.1} parent=1 // pred_fallthru
      _
    %141 = vsyncpa [#allocation3], 1
    %142 = vsyncpa [#allocation6], 1
    %143 = vsyncpa [#allocation4], 1

// kernel: tpu_custom_call.1
$region0: #{tpu_custom_call.1}
  #allocation0 [shape = 'u32[]', space=smem, size = 0x4, offset = 0x4, fixed_abs, tag = 'smem constant byte address 0x4 - core index']
  #allocation1 [shape = 'u32[144,128]{1,0:T(1,128)}', space=vmem, size = 0x12000, scoped, tag = 'internal scratch']
  %s0 = inlined_call_operand.hbm [shape: f32[8,32], index: 0, kind: input, shape index: {}]
  %s1 = inlined_call_operand.hbm [shape: f32[32,128], index: 1, kind: input, shape index: {}]
  %s2 = inlined_call_operand.vmem [shape: f32[1,128], index: 2, kind: input, shape index: {}]
  %s3 = inlined_call_operand.hbm [shape: f32[8,128], index: 3, kind: output, shape index: {}]
  %s4 = sld [smem:[#allocation0]]
  $region30: #{tpu_custom_call.1} parent=0
    _
  %s6 = ssub.s32 1, %s4
  %s7 = scalar_select 0, %s6, %s4
  $region1: #{tpu_custom_call.1} parent=0
    #allocation2 [shape = 'u8[4096]{0}', space=vmem, size = 0x1000, scoped, tag = 'input window, operand 0, single buffered']
    #allocation3 [shape = 's32[1]{0}', space=sflag, size = 0x4, scoped, tag = 'scoped memory for tpu_custom_call.1']
    #allocation4 [shape = 's32[1]{0}', space=sflag, size = 0x4, scoped, tag = 'scoped memory for tpu_custom_call.1']
    #allocation5 [shape = 'u8[16384]{0}', space=vmem, size = 0x4000, scoped, tag = 'input window, operand 1, single buffered']
    #allocation6 [shape = 's32[1]{0}', space=sflag, size = 0x4, scoped, tag = 'scoped memory for tpu_custom_call.1']
    #allocation7 [shape = 'u8[4096]{0}', space=vmem, size = 0x1000, scoped, tag = 'output window, operand 0, single buffered']
    %8 = vsyncpa [#allocation3], 0
    %9 = vsyncpa [#allocation6], 0
    %10 = vsyncpa [#allocation4], 0
    // Predicated region
    $region2: #{tpu_custom_call.1} parent=1 // pred_check
      _
    $region3: #{tpu_custom_call.1} parent=1 // pred_check_branch
      %12 = sbr.rel (0) target = $region5
    $region4: #{tpu_custom_call.1} parent=1 // pred_region
      %s14 = ssub.s32 128, 128
      %15 = vsyncadd [#allocation3], %s14
      %s17 = sshll.u32 [#allocation2], 4
      %s18 = int_to_ptr.vmem [resolvable:$true] %s17
      %20 = dma.hbm_to_vmem [thread:$0]  %s0, 128, %s18, [#allocation3]
    $region5: #{tpu_custom_call.1} parent=1 // pred_fallthru
      _
    // Predicated region
    $region6: #{tpu_custom_call.1} parent=1 // pred_check
      _
    $region7: #{tpu_custom_call.1} parent=1 // pred_check_branch
      %22 = sbr.rel (0) target = $region9
    $region8: #{tpu_custom_call.1} parent=1 // pred_region
      %s24 = ssub.s32 512, 512
      %25 = vsyncadd [#allocation6], %s24
      %s26 = sshll.u32 [#allocation5], 4
      %s27 = int_to_ptr.vmem [resolvable:$true] %s26
      %32 = dma.hbm_to_vmem [thread:$0]  %s1, 512, %s27, [#allocation6], 128, 128, 8
    $region9: #{tpu_custom_call.1} parent=1 // pred_fallthru
      _
    // Predicated region
    $region10: #{tpu_custom_call.1} parent=1 // pred_check
      _
    $region11: #{tpu_custom_call.1} parent=1 // pred_check_branch
      %34 = sbr.rel (0) target = $region13
    $region12: #{tpu_custom_call.1} parent=1 // pred_region
      _
    $region13: #{tpu_custom_call.1} parent=1 // pred_fallthru
      _
    // Predicated region
    $region14: #{tpu_custom_call.1} parent=1 // pred_check
      _
    $region15: #{tpu_custom_call.1} parent=1 // pred_check_branch
      %36 = sbr.rel (0) target = $region17
    $region16: #{tpu_custom_call.1} parent=1 // pred_region
      %37 = dma.done [#allocation3], 128
    $region17: #{tpu_custom_call.1} parent=1 // pred_fallthru
      _
    // Predicated region
    $region18: #{tpu_custom_call.1} parent=1 // pred_check
      _
    $region19: #{tpu_custom_call.1} parent=1 // pred_check_branch
      %39 = sbr.rel (0) target = $region21
    $region20: #{tpu_custom_call.1} parent=1 // pred_region
      %40 = dma.done [#allocation6], 512
    $region21: #{tpu_custom_call.1} parent=1 // pred_fallthru
      _
    %v41 = vld [vmem:[#allocation2] sm:$0xff]
    %v42 = vld [vmem:[#allocation5] sm:$0xff]
    %v43 = vld [vmem:[#allocation5 + $0x8] sm:$0xff]
    %v44 = vld [vmem:[#allocation5 + $0x10] sm:$0xff]
    %v45 = vld [vmem:[#allocation5 + $0x18] sm:$0xff]
    %v46 = vld [vmem:[%s2] sm:$0x1]
    %v48 = vlaneseq
    %v49 = vshrl.u32 %v48, 7
    %v50 = vsub.s32 0, %v49
    %v51 = vrot.slane %v46, %v50
    %vm53 = vcmask 261120
    %v55 = vsel %vm53, %v41, 0
    %57 = vmatprep.subr.mxu0 0.0
    %58 = vmatpush1.msra.mxu0 %v42
    %59 = vmatprep.subr.mxu0 0.0
    %60 = vmatpush1.msra.mxu0 %v43
    %61 = vmatprep.subr.mxu0 0.0
    %62 = vmatpush1.msra.mxu0 %v44
    %63 = vmatprep.subr.mxu0 0.0
    %64 = vmatpush1.msra.mxu0 %v45
    %65 = vmatprep.subr.mxu0 0.0
    %66 = vmatpush1.msra.mxu0 0.0
    %67 = vmatprep.subr.mxu0 0.0
    %68 = vmatpush1.msra.mxu0 0.0
    %69 = vmatprep.subr.mxu0 0.0
    %70 = vmatpush1.msra.mxu0 0.0
    %71 = vmatprep.subr.mxu0 0.0
    %72 = vmatpush1.msra.mxu0 0.0
    %73 = vmatprep.subr.mxu0 0.0
    %74 = vmatpush1.msra.mxu0 0.0
    %75 = vmatprep.subr.mxu0 0.0
    %76 = vmatpush1.msra.mxu0 0.0
    %77 = vmatprep.subr.mxu0 0.0
    %78 = vmatpush1.msra.mxu0 0.0
    %79 = vmatprep.subr.mxu0 0.0
    %80 = vmatpush1.msra.mxu0 0.0
    %81 = vmatprep.subr.mxu0 0.0
    %82 = vmatpush1.msra.mxu0 0.0
    %83 = vmatprep.subr.mxu0 0.0
    %84 = vmatpush1.msra.mxu0 0.0
    %85 = vmatprep.subr.mxu0 0.0
    %86 = vmatpush1.msra.mxu0 0.0
    %87 = vmatprep.subr.mxu0 0.0
    %88 = vmatpush1.msra.mxu0 0.0
    %89 = vmatprep.subr.mxu0 0.0
    %90 = vmatpush1.msra.mxu0 0.0
    %91 = vmatprep.subr.mxu0 0.0
    %92 = vmatpush1.msra.mxu0 0.0
    %93 = vmatprep.subr.mxu0 0.0
    %94 = vmatpush1.msra.mxu0 0.0
    %95 = vmatprep.subr.mxu0 0.0
    %96 = vmatpush1.msra.mxu0 0.0
    %97 = vmatprep.subr.mxu0 0.0
    %98 = vmatpush1.msra.mxu0 0.0
    %99 = vmatprep.subr.mxu0 0.0
    %100 = vmatpush1.msra.mxu0 0.0
    %101 = vmatprep.subr.mxu0 0.0
    %102 = vmatpush1.msra.mxu0 0.0
    %103 = vmatprep.subr.mxu0 0.0
    %104 = vmatpush1.msra.mxu0 0.0
    %105 = vmatprep.subr.mxu0 0.0
    %106 = vmatpush1.msra.mxu0 0.0
    %107 = vmatprep.subr.mxu0 0.0
    %108 = vmatpush1.msra.mxu0 0.0
    %109 = vmatprep.subr.mxu0 0.0
    %110 = vmatpush1.msra.mxu0 0.0
    %111 = vmatprep.subr.mxu0 0.0
    %112 = vmatpush1.msra.mxu0 0.0
    %113 = vmatprep.subr.mxu0 0.0
    %114 = vmatpush1.msra.mxu0 0.0
    %115 = vmatprep.subr.mxu0 0.0
    %116 = vmatpush1.msra.mxu0 0.0
    %117 = vmatprep.subr.mxu0 0.0
    %118 = vmatpush1.msra.mxu0 0.0
    %119 = vmatprep.subr.mxu0 0.0
    %120 = vmatpush1.msra.mxu0 0.0
    %121 = vmatprep.mubr.f32.mxu0 0.0
    %122 = vmatmul.mubr.f32.gmra.mrb[0].mxu0 %v55
    %v123 = vpop.f32.mrb[0].mxu0
    %v124 = vadd.f32 %v51, %v123
    %v125 = vpop.f32.mrb[0].mxu0
    %126 = vdwg.mxu0
    %127 = vst [vmem:[#allocation7] sm:$0xff] %v124
    // Predicated region
    $region22: #{tpu_custom_call.1} parent=1 // pred_check
      _
    $region23: #{tpu_custom_call.1} parent=1 // pred_check_branch
      %129 = sbr.rel (0) target = $region25
    $region24: #{tpu_custom_call.1} parent=1 // pred_region
      %s131 = ssub.s32 128, 128
      %132 = vsyncadd [#allocation4], %s131
      %s134 = sshll.u32 [#allocation7], 4
      %s135 = int_to_ptr.vmem [resolvable:$true] %s134
      %137 = dma.vmem_to_hbm [thread:$0]  %s135, 128, %s3, [#allocation4]
    $region25: #{tpu_custom_call.1} parent=1 // pred_fallthru
      _
    // Predicated region
    $region26: #{tpu_custom_call.1} parent=1 // pred_check
      _
    $region27: #{tpu_custom_call.1} parent=1 // pred_check_branch
      %139 = sbr.rel (0) target = $region29
    $region28: #{tpu_custom_call.1} parent=1 // pred_region
      %140 = dma.done [#allocation4], 128
    $region29: #{tpu_custom_call.1} parent=1 // pred_fallthru
      _
    %141 = vsyncpa [#allocation3], 1
    %142 = vsyncpa [#allocation6], 1
    %143 = vsyncpa [#allocation4], 1

</llo_original>
